<compile_context>
chip_gen: v5e
topology: v5e:2x2
jax: 0.10.0
libtpu: 0.0.40
codegen_flags: <defaults>
</compile_context>

<pallas_src>
import functools
import math

import jax
import jax.numpy as jnp
from jax.experimental import pallas as pl
from jax.experimental.pallas import tpu as pltpu


# ----------------------------------------------------------------------------
# Elementwise helpers
# ----------------------------------------------------------------------------
def _erf(x):
    # Abramowitz & Stegun 7.1.26 rational approximation (|err| < 1.5e-7).
    a1, a2, a3, a4, a5 = 0.254829592, -0.284496736, 1.421413741, -1.453152027, 1.061405429
    p = 0.3275911
    s = jnp.where(x >= 0.0, 1.0, -1.0)
    ax = jnp.abs(x)
    t = 1.0 / (1.0 + p * ax)
    poly = ((((a5 * t + a4) * t + a3) * t + a2) * t + a1) * t
    return s * (1.0 - poly * jnp.exp(-ax * ax))


def _gelu_exact(x):
    return 0.5 * x * (1.0 + _erf(x * (1.0 / math.sqrt(2.0))))


def _stack_taps(x_f32, ksize):
    """(C, L) f32 -> (ksize*C, L) bf16: taps stacked along sublanes.

    Row k*C + ci holds x[ci, l + (k - pad)], with zero columns implementing the
    'same' padding (so no separate boundary masks are needed).
    """
    xb = x_f32.astype(jnp.bfloat16)
    c, l = xb.shape
    pad = (ksize - 1) // 2
    pieces = []
    for k in range(ksize):
        off = k - pad                      # output[l] uses x[:, l + off]
        if off < 0:
            s = jnp.concatenate(
                [jnp.zeros((c, -off), jnp.bfloat16), xb[:, : l + off]], axis=1)
        elif off > 0:
            s = jnp.concatenate(
                [xb[:, off:], jnp.zeros((c, off), jnp.bfloat16)], axis=1)
        else:
            s = xb
        pieces.append(s)
    return jnp.concatenate(pieces, axis=0)


# ----------------------------------------------------------------------------
# Phase 1: conv0 + per-channel sum / sum-of-squares accumulation
# ----------------------------------------------------------------------------
def _conv_stats_kernel(x_ref, w_ref, b_ref, h_ref, stats_ref, *, bb, ksize):
    @pl.when(pl.program_id(0) == 0)
    def _init():
        stats_ref[...] = jnp.zeros_like(stats_ref)

    w = w_ref[...]                         # (C_out, K*C_in)  bf16
    b = b_ref[...]                         # (C_out, 1)       f32
    part = jnp.zeros(stats_ref.shape, jnp.float32)
    for j in range(bb):                    # static, small (<= 8)
        xs = _stack_taps(x_ref[j], ksize)                      # (K*C_in, L) bf16
        h = jnp.dot(w, xs, preferred_element_type=jnp.float32) + b
        h_ref[j] = h
        part = part + jnp.concatenate(
            [jnp.sum(h, axis=1, keepdims=True),
             jnp.sum(h * h, axis=1, keepdims=True)], axis=1)
    stats_ref[...] += part


# ----------------------------------------------------------------------------
# Phase 2: BN0 (precomputed affine) + GELU + conv1 + stats accumulation
# ----------------------------------------------------------------------------
def _bn_gelu_conv_stats_kernel(h0_ref, sc_ref, sh_ref, w_ref, b_ref,
                               h1_ref, stats_ref, *, bb, ksize):
    @pl.when(pl.program_id(0) == 0)
    def _init():
        stats_ref[...] = jnp.zeros_like(stats_ref)

    w = w_ref[...]
    b = b_ref[...]
    sc = sc_ref[...]                       # (C_out, 1) = gamma / sqrt(var+eps)
    sh = sh_ref[...]                       # (C_out, 1) = beta - mean*scale
    part = jnp.zeros(stats_ref.shape, jnp.float32)
    for j in range(bb):
        g = _gelu_exact(h0_ref[j] * sc + sh)
        xs = _stack_taps(g, ksize)                             # (K*C_out, L) bf16
        h = jnp.dot(w, xs, preferred_element_type=jnp.float32) + b
        h1_ref[j] = h
        part = part + jnp.concatenate(
            [jnp.sum(h, axis=1, keepdims=True),
             jnp.sum(h * h, axis=1, keepdims=True)], axis=1)
    stats_ref[...] += part


# ----------------------------------------------------------------------------
# Phase 3: BN1 + GELU + dropout (counter-based hash PRNG) + store
# ----------------------------------------------------------------------------
def _bn_gelu_dropout_kernel(h1_ref, sc_ref, sh_ref, seed_ref, o_ref,
                            *, bb, p_drop, chan, length):
    sc = sc_ref[...]
    sh = sh_ref[...]
    tile = pl.program_id(0)

    if p_drop > 0.0:
        thresh = int(round(p_drop * (1 << 24)))
        inv_keep = 1.0 / (1.0 - p_drop)
        seed = seed_ref[0].astype(jnp.uint32)
        # Hoisted once per tile (identical for every batch element in the tile).
        row = jax.lax.broadcasted_iota(jnp.int32, (chan, length), 0)
        col = jax.lax.broadcasted_iota(jnp.int32, (chan, length), 1)
        elem = (row * length + col).astype(jnp.uint32)

    for j in range(bb):
        g = _gelu_exact(h1_ref[j] * sc + sh)
        if p_drop > 0.0:
            # splitmix32-style hash of (global element counter, seed): portable on
            # Mosaic and the interpret fallback, independent stream per tile/element.
            base = ((tile * bb + j) * (chan * length)).astype(jnp.uint32)
            z = elem + base + seed * jnp.uint32(0x9E3779B9)
            z = z ^ (z >> jnp.uint32(16))
            z = z * jnp.uint32(0x7FEB352D)
            z = z ^ (z >> jnp.uint32(15))
            z = z * jnp.uint32(0x846CA68B)
            z = z ^ (z >> jnp.uint32(16))
            r24 = (z >> jnp.uint32(8)).astype(jnp.int32)       # uniform in [0, 2^24)
            g = jnp.where(r24 >= thresh, g * inv_keep, 0.0)    # keep prob = 1 - p
        o_ref[j] = g.astype(o_ref.dtype)


# ----------------------------------------------------------------------------
# Wrapper
# ----------------------------------------------------------------------------
def _bn_affine(stats, gamma, beta, count, eps):
    """(C,2) [sum, sumsq] -> per-channel (scale, shift) columns.  O(C) work."""
    s = stats[:, 0]
    sq = stats[:, 1]
    mean = s / count
    var = jnp.maximum(sq / count - mean * mean, 0.0)  # biased var, as torch BN fwd
    inv = jax.lax.rsqrt(var + eps)
    scale = gamma * inv
    shift = beta - mean * scale
    return (scale.reshape(-1, 1).astype(jnp.float32),
            shift.reshape(-1, 1).astype(jnp.float32))


def _pick_batch_block(n, c, length, max_block_elems=65536, max_bb=8):
    """Largest divisor of n (<= max_bb) whose (bb, C, L) block stays small."""
    bb = 1
    for cand in range(2, min(n, max_bb) + 1):
        if n % cand == 0 and cand * c * length <= max_block_elems:
            bb = cand
    return bb


def conv_block(x, params, *, p_drop=0.1, seed=0, eps=1e-5):
    """x: (N, C_in, L) float32 (PyTorch Conv1d layout). Returns (N, C_out, L) f32."""
    w0, b0, g0, be0, w1, b1, g1, be1 = params
    n, c_in, length = x.shape
    c_out, w_cin, ksize = w0.shape
    assert w_cin == c_in, "conv0 weight C_in mismatch"
    assert ksize % 2 == 1, "only odd kernel_size ('same' padding) supported"

    bb = _pick_batch_block(n, max(c_in, c_out), length)
    grid = (n // bb,)
    count = float(n * length)

    # One-time tiny parameter re-layouts (O(C^2 K), not activation-sized):
    # stacked-tap weights in bf16 for the MXU, biases as (C, 1) f32 columns.
    w0s = jnp.transpose(w0, (0, 2, 1)).reshape(c_out, ksize * c_in).astype(jnp.bfloat16)
    w1s = jnp.transpose(w1, (0, 2, 1)).reshape(c_out, ksize * c_out).astype(jnp.bfloat16)
    b0c = b0.reshape(c_out, 1).astype(jnp.float32)
    b1c = b1.reshape(c_out, 1).astype(jnp.float32)
    seed_arr = jnp.asarray([seed], dtype=jnp.int32)

    act_in = lambda c: pl.BlockSpec((bb, c, length), lambda i: (i, 0, 0))
    vec_in = lambda cols: pl.BlockSpec((c_out, cols), lambda i: (0, 0))
    act_out = pl.BlockSpec((bb, c_out, length), lambda i: (i, 0, 0))
    stats_out = pl.BlockSpec((c_out, 2), lambda i: (0, 0))      # resident accumulator
    act_shape = jax.ShapeDtypeStruct((n, c_out, length), jnp.float32)
    stats_shape = jax.ShapeDtypeStruct((c_out, 2), jnp.float32)

    # --- phase 1: conv0 + stats0 -------------------------------------------
    h0, stats0 = pl.pallas_call(
        functools.partial(_conv_stats_kernel, bb=bb, ksize=ksize),
        grid=grid,
        in_specs=[act_in(c_in), vec_in(ksize * c_in), vec_in(1)],
        out_specs=[act_out, stats_out],
        out_shape=[act_shape, stats_shape],
        compiler_params=pltpu.CompilerParams(dimension_semantics=("arbitrary",)),
    )(x.astype(jnp.float32), w0s, b0c)

    sc0, sh0 = _bn_affine(stats0, g0, be0, count, eps)

    # --- phase 2: BN0 + GELU + conv1 + stats1 -------------------------------
    h1, stats1 = pl.pallas_call(
        functools.partial(_bn_gelu_conv_stats_kernel, bb=bb, ksize=ksize),
        grid=grid,
        in_specs=[act_in(c_out), vec_in(1), vec_in(1), vec_in(ksize * c_out), vec_in(1)],
        out_specs=[act_out, stats_out],
        out_shape=[act_shape, stats_shape],
        compiler_params=pltpu.CompilerParams(dimension_semantics=("arbitrary",)),
    )(h0, sc0, sh0, w1s, b1c)

    sc1, sh1 = _bn_affine(stats1, g1, be1, count, eps)

    # --- phase 3: BN1 + GELU + dropout --------------------------------------
    out = pl.pallas_call(
        functools.partial(_bn_gelu_dropout_kernel, bb=bb, p_drop=float(p_drop),
                          chan=c_out, length=length),
        grid=grid,
        in_specs=[act_in(c_out), vec_in(1), vec_in(1),
                  pl.BlockSpec(memory_space=pltpu.MemorySpace.SMEM)],
        out_specs=act_out,
        out_shape=act_shape,
        compiler_params=pltpu.CompilerParams(dimension_semantics=("parallel",)),
    )(h1, sc1, sh1, seed_arr)
    return out


def init_params(key, in_dim, out_dim, kernel_size=3):
    """PyTorch-default-like init; conv weights in torch layout (C_out, C_in, K)."""
    k0w, k0b, k1w, k1b = jax.random.split(key, 4)
    bound0 = 1.0 / math.sqrt(in_dim * kernel_size)
    bound1 = 1.0 / math.sqrt(out_dim * kernel_size)
    w0 = jax.random.uniform(k0w, (out_dim, in_dim, kernel_size), jnp.float32, -bound0, bound0)
    b0 = jax.random.uniform(k0b, (out_dim,), jnp.float32, -bound0, bound0)
    w1 = jax.random.uniform(k1w, (out_dim, out_dim, kernel_size), jnp.float32, -bound1, bound1)
    b1 = jax.random.uniform(k1b, (out_dim,), jnp.float32, -bound1, bound1)
    g0 = jnp.ones((out_dim,), jnp.float32)
    be0 = jnp.zeros((out_dim,), jnp.float32)
    g1 = jnp.ones((out_dim,), jnp.float32)
    be1 = jnp.zeros((out_dim,), jnp.float32)
    return (w0, b0, g0, be0, w1, b1, g1, be1)


if __name__ == "__main__":
    N, C_IN, C_OUT, L, K = 2, 4, 8, 16, 3
    key = jax.random.PRNGKey(0)
    kx, kp = jax.random.split(key)
    x = jax.random.normal(kx, (N, C_IN, L), jnp.float32)      # PyTorch NCL input
    params = init_params(kp, C_IN, C_OUT, kernel_size=K)

    out = conv_block(x, params, p_drop=0.1, seed=1234)
    out = jax.block_until_ready(out)
    assert out.shape == (N, C_OUT, L)
    assert bool(jnp.all(jnp.isfinite(out)))
    print("KERNEL_OK")
</pallas_src>

<mosaic_0001>
module attributes {stable_mosaic.version = 11 : i64} {
  func.func @_conv_stats_kernel(%arg0: i32, %arg1: memref<2x4x16xf32, #tpu.memory_space<vmem>>, %arg2: memref<8x12xbf16, #tpu.memory_space<vmem>>, %arg3: memref<8x1xf32, #tpu.memory_space<vmem>>, %arg4: memref<2x8x16xf32, #tpu.memory_space<vmem>>, %arg5: memref<8x2xf32, #tpu.memory_space<vmem>>) attributes {dimension_semantics = [#tpu.dimension_semantics<arbitrary>], iteration_bounds = array<i64: 1>, scalar_prefetch = 0 : i64, scratch_operands = 0 : i64, tpu.core_type = #tpu.core_type<tc>, window_params = [{transform_indices = @transform_0, window_bounds = array<i64: 2, 4, 16>}, {pipeline_mode = #tpu.pipeline_mode<synchronous>, transform_indices = @transform_1, window_bounds = array<i64: 8, 12>}, {pipeline_mode = #tpu.pipeline_mode<synchronous>, transform_indices = @transform_2, window_bounds = array<i64: 8, 1>}, {transform_indices = @transform_3, window_bounds = array<i64: 2, 8, 16>}, {pipeline_mode = #tpu.pipeline_mode<synchronous>, transform_indices = @transform_4, window_bounds = array<i64: 8, 2>}]} {
    %c0_i32 = arith.constant 0 : i32
    %0 = arith.cmpi eq, %arg0, %c0_i32 : i32
    %1 = arith.extui %0 : i1 to i32
    %c0_i32_0 = arith.constant 0 : i32
    %2 = arith.cmpi ne, %1, %c0_i32_0 : i32
    scf.if %2 {
      %cst_29 = arith.constant 0.000000e+00 : f32
      %55 = vector.broadcast %cst_29 : f32 to vector<8x2xf32>
      %c0_30 = arith.constant 0 : index
      %c0_31 = arith.constant 0 : index
      %56 = vector.load %arg5[%c0_30, %c0_31] : memref<8x2xf32, #tpu.memory_space<vmem>>, vector<8x2xf32>
      tpu.vector_store %arg5[%c0_30, %c0_31], %55 {strides = array<i32>} : memref<8x2xf32, #tpu.memory_space<vmem>>, vector<8x2xf32>,
    } else {
    }
    %c0 = arith.constant 0 : index
    %c0_1 = arith.constant 0 : index
    %3 = vector.load %arg2[%c0, %c0_1] : memref<8x12xbf16, #tpu.memory_space<vmem>>, vector<8x12xbf16>
    %c0_2 = arith.constant 0 : index
    %c0_3 = arith.constant 0 : index
    %4 = vector.load %arg3[%c0_2, %c0_3] : memref<8x1xf32, #tpu.memory_space<vmem>>, vector<8x1xf32>
    %cst = arith.constant 0.000000e+00 : f32
    %5 = vector.broadcast %cst : f32 to vector<8x2xf32>
    %c0_4 = arith.constant 0 : index
    %c0_5 = arith.constant 0 : index
    %c0_6 = arith.constant 0 : index
    %6 = vector.load %arg1[%c0_4, %c0_5, %c0_6] : memref<2x4x16xf32, #tpu.memory_space<vmem>>, vector<1x4x16xf32>
    %7 = vector.shape_cast %6 : vector<1x4x16xf32> to vector<4x16xf32>
    %8 = arith.truncf %7 : vector<4x16xf32> to vector<4x16xbf16>
    %cst_7 = arith.constant 0.000000e+00 : bf16
    %9 = vector.broadcast %cst_7 : bf16 to vector<4x1xbf16>
    %10 = vector.extract_strided_slice %8 {offsets = [0, 0], sizes = [4, 15], strides = [1, 1]} : vector<4x16xbf16> to vector<4x15xbf16>
    %11 = tpu.concatenate %9, %10 in 1 : vector<4x1xbf16>, vector<4x15xbf16> -> vector<4x16xbf16>
    %12 = vector.extract_strided_slice %8 {offsets = [0, 1], sizes = [4, 15], strides = [1, 1]} : vector<4x16xbf16> to vector<4x15xbf16>
    %cst_8 = arith.constant 0.000000e+00 : bf16
    %13 = vector.broadcast %cst_8 : bf16 to vector<4x1xbf16>
    %14 = tpu.concatenate %12, %13 in 1 : vector<4x15xbf16>, vector<4x1xbf16> -> vector<4x16xbf16>
    %15 = tpu.concatenate %11, %8, %14 in 0 : vector<4x16xbf16>, vector<4x16xbf16>, vector<4x16xbf16> -> vector<12x16xbf16>
    %cst_9 = arith.constant dense<0.000000e+00> : vector<8x16xf32>
    %16 = tpu.matmul %3, %15, %cst_9 {dimension_numbers = #tpu.dot_dimension_numbers<[1], [0], [0], [1], [0, 0, 1, 1], [], []>} : vector<8x12xbf16>, vector<12x16xbf16>, vector<8x16xf32> -> vector<8x16xf32>
    %17 = vector.broadcast %4 : vector<8x1xf32> to vector<8x16xf32>
    %18 = arith.addf %16, %17 : vector<8x16xf32>
    %c0_10 = arith.constant 0 : index
    %c0_11 = arith.constant 0 : index
    %c0_12 = arith.constant 0 : index
    %19 = vector.load %arg4[%c0_10, %c0_11, %c0_12] : memref<2x8x16xf32, #tpu.memory_space<vmem>>, vector<1x8x16xf32>
    %20 = vector.shape_cast %19 : vector<1x8x16xf32> to vector<8x16xf32>
    %21 = vector.shape_cast %18 : vector<8x16xf32> to vector<1x8x16xf32>
    tpu.vector_store %arg4[%c0_10, %c0_11, %c0_12], %21 {strides = array<i32>} : memref<2x8x16xf32, #tpu.memory_space<vmem>>, vector<1x8x16xf32>,
    %cst_13 = arith.constant dense<0.000000e+00> : vector<8xf32>
    %22 = vector.multi_reduction <add>, %18, %cst_13 [1] : vector<8x16xf32> to vector<8xf32>
    %23 = vector.shape_cast %22 : vector<8xf32> to vector<8x1xf32>
    %24 = arith.mulf %18, %18 : vector<8x16xf32>
    %cst_14 = arith.constant dense<0.000000e+00> : vector<8xf32>
    %25 = vector.multi_reduction <add>, %24, %cst_14 [1] : vector<8x16xf32> to vector<8xf32>
    %26 = vector.shape_cast %25 : vector<8xf32> to vector<8x1xf32>
    %27 = tpu.concatenate %23, %26 in 1 : vector<8x1xf32>, vector<8x1xf32> -> vector<8x2xf32>
    %28 = arith.addf %5, %27 : vector<8x2xf32>
    %c1 = arith.constant 1 : index
    %c0_15 = arith.constant 0 : index
    %c0_16 = arith.constant 0 : index
    %29 = vector.load %arg1[%c1, %c0_15, %c0_16] : memref<2x4x16xf32, #tpu.memory_space<vmem>>, vector<1x4x16xf32>
    %30 = vector.shape_cast %29 : vector<1x4x16xf32> to vector<4x16xf32>
    %31 = arith.truncf %30 : vector<4x16xf32> to vector<4x16xbf16>
    %cst_17 = arith.constant 0.000000e+00 : bf16
    %32 = vector.broadcast %cst_17 : bf16 to vector<4x1xbf16>
    %33 = vector.extract_strided_slice %31 {offsets = [0, 0], sizes = [4, 15], strides = [1, 1]} : vector<4x16xbf16> to vector<4x15xbf16>
    %34 = tpu.concatenate %32, %33 in 1 : vector<4x1xbf16>, vector<4x15xbf16> -> vector<4x16xbf16>
    %35 = vector.extract_strided_slice %31 {offsets = [0, 1], sizes = [4, 15], strides = [1, 1]} : vector<4x16xbf16> to vector<4x15xbf16>
    %cst_18 = arith.constant 0.000000e+00 : bf16
    %36 = vector.broadcast %cst_18 : bf16 to vector<4x1xbf16>
    %37 = tpu.concatenate %35, %36 in 1 : vector<4x15xbf16>, vector<4x1xbf16> -> vector<4x16xbf16>
    %38 = tpu.concatenate %34, %31, %37 in 0 : vector<4x16xbf16>, vector<4x16xbf16>, vector<4x16xbf16> -> vector<12x16xbf16>
    %cst_19 = arith.constant dense<0.000000e+00> : vector<8x16xf32>
    %39 = tpu.matmul %3, %38, %cst_19 {dimension_numbers = #tpu.dot_dimension_numbers<[1], [0], [0], [1], [0, 0, 1, 1], [], []>} : vector<8x12xbf16>, vector<12x16xbf16>, vector<8x16xf32> -> vector<8x16xf32>
    %40 = vector.broadcast %4 : vector<8x1xf32> to vector<8x16xf32>
    %41 = arith.addf %39, %40 : vector<8x16xf32>
    %c1_20 = arith.constant 1 : index
    %c0_21 = arith.constant 0 : index
    %c0_22 = arith.constant 0 : index
    %42 = vector.load %arg4[%c1_20, %c0_21, %c0_22] : memref<2x8x16xf32, #tpu.memory_space<vmem>>, vector<1x8x16xf32>
    %43 = vector.shape_cast %42 : vector<1x8x16xf32> to vector<8x16xf32>
    %44 = vector.shape_cast %41 : vector<8x16xf32> to vector<1x8x16xf32>
    tpu.vector_store %arg4[%c1_20, %c0_21, %c0_22], %44 {strides = array<i32>} : memref<2x8x16xf32, #tpu.memory_space<vmem>>, vector<1x8x16xf32>,
    %cst_23 = arith.constant dense<0.000000e+00> : vector<8xf32>
    %45 = vector.multi_reduction <add>, %41, %cst_23 [1] : vector<8x16xf32> to vector<8xf32>
    %46 = vector.shape_cast %45 : vector<8xf32> to vector<8x1xf32>
    %47 = arith.mulf %41, %41 : vector<8x16xf32>
    %cst_24 = arith.constant dense<0.000000e+00> : vector<8xf32>
    %48 = vector.multi_reduction <add>, %47, %cst_24 [1] : vector<8x16xf32> to vector<8xf32>
    %49 = vector.shape_cast %48 : vector<8xf32> to vector<8x1xf32>
    %50 = tpu.concatenate %46, %49 in 1 : vector<8x1xf32>, vector<8x1xf32> -> vector<8x2xf32>
    %51 = arith.addf %28, %50 : vector<8x2xf32>
    %c0_25 = arith.constant 0 : index
    %c0_26 = arith.constant 0 : index
    %52 = vector.load %arg5[%c0_25, %c0_26] : memref<8x2xf32, #tpu.memory_space<vmem>>, vector<8x2xf32>
    %53 = arith.addf %52, %51 : vector<8x2xf32>
    %c0_27 = arith.constant 0 : index
    %c0_28 = arith.constant 0 : index
    %54 = vector.load %arg5[%c0_27, %c0_28] : memref<8x2xf32, #tpu.memory_space<vmem>>, vector<8x2xf32>
    tpu.vector_store %arg5[%c0_27, %c0_28], %53 {strides = array<i32>} : memref<8x2xf32, #tpu.memory_space<vmem>>, vector<8x2xf32>,
    return
  }
  func.func @transform_0(%arg0: i32) -> (i32, i32, i32) {
    %c0_i32 = arith.constant 0 : i32
    %c0_i32_0 = arith.constant 0 : i32
    %c0_i32_1 = arith.constant 0 : i32
    return %arg0, %c0_i32, %c0_i32_0 : i32, i32, i32
  }
  func.func @transform_1(%arg0: i32) -> (i32, i32) {
    %c0_i32 = arith.constant 0 : i32
    %c0_i32_0 = arith.constant 0 : i32
    %c0_i32_1 = arith.constant 0 : i32
    return %c0_i32, %c0_i32_0 : i32, i32
  }
  func.func @transform_2(%arg0: i32) -> (i32, i32) {
    %c0_i32 = arith.constant 0 : i32
    %c0_i32_0 = arith.constant 0 : i32
    %c0_i32_1 = arith.constant 0 : i32
    return %c0_i32, %c0_i32_0 : i32, i32
  }
  func.func @transform_3(%arg0: i32) -> (i32, i32, i32) {
    %c0_i32 = arith.constant 0 : i32
    %c0_i32_0 = arith.constant 0 : i32
    %c0_i32_1 = arith.constant 0 : i32
    return %arg0, %c0_i32, %c0_i32_0 : i32, i32, i32
  }
  func.func @transform_4(%arg0: i32) -> (i32, i32) {
    %c0_i32 = arith.constant 0 : i32
    %c0_i32_0 = arith.constant 0 : i32
    %c0_i32_1 = arith.constant 0 : i32
    return %c0_i32, %c0_i32_0 : i32, i32
  }
}

</mosaic_0001>

<llo_original>
// kernel: tpu_custom_call.1
$region0: #{tpu_custom_call.1}
  #allocation0 [shape = 'u32[]', space=smem, size = 0x4, offset = 0x4, fixed_abs, tag = 'smem constant byte address 0x4 - core index']
  #allocation1 [shape = 'u32[72,128]{1,0:T(1,128)}', space=vmem, size = 0x9000, scoped, tag = 'internal scratch']
  %s0 = inlined_call_operand.vmem [shape: f32[2,4,16], index: 0, kind: input, shape index: {}]
  %s1 = inlined_call_operand.hbm [shape: bf16[8,12], index: 1, kind: input, shape index: {}]
  %s2 = inlined_call_operand.vmem [shape: f32[8,1], index: 2, kind: input, shape index: {}]
  %s3 = inlined_call_operand.hbm [shape: f32[2,8,16], index: 3, kind: output, shape index: {0}]
  %s4 = inlined_call_operand.vmem [shape: f32[8,2], index: 4, kind: output, shape index: {1}]
  %5 = xla_tuple %s3, %s4
  %s6 = sld [smem:[#allocation0]]
  $region38: #{tpu_custom_call.1} parent=0
    _
  %s8 = ssub.s32 1, %s6
  %s9 = scalar_select 0, %s8, %s6
  $region1: #{tpu_custom_call.1} parent=0
    #allocation2 [shape = 'u8[2048]{0}', space=vmem, size = 0x800, scoped, tag = 'input window, operand 1, single buffered']
    #allocation3 [shape = 's32[1]{0}', space=sflag, size = 0x4, scoped, tag = 'scoped memory for tpu_custom_call.1']
    #allocation4 [shape = 's32[1]{0}', space=sflag, size = 0x4, scoped, tag = 'scoped memory for tpu_custom_call.1']
    #allocation5 [shape = 'u8[8192]{0}', space=vmem, size = 0x2000, scoped, tag = 'output window, operand 0, single buffered']
    %10 = vsyncpa [#allocation3], 0
    %11 = vsyncpa [#allocation4], 0
    // Predicated region
    $region2: #{tpu_custom_call.1} parent=1 // pred_check
      _
    $region3: #{tpu_custom_call.1} parent=1 // pred_check_branch
      %13 = sbr.rel (0) target = $region5
    $region4: #{tpu_custom_call.1} parent=1 // pred_region
      _
    $region5: #{tpu_custom_call.1} parent=1 // pred_fallthru
      _
    // Predicated region
    $region6: #{tpu_custom_call.1} parent=1 // pred_check
      _
    $region7: #{tpu_custom_call.1} parent=1 // pred_check_branch
      %15 = sbr.rel (0) target = $region9
    $region8: #{tpu_custom_call.1} parent=1 // pred_region
      %17 = vsyncadd [#allocation3], 0
      %s19 = sshll.u32 %s1, 4
      %s20 = int_to_ptr.hbm [resolvable:$true] %s19
      %s21 = sshll.u32 [#allocation2], 4
      %s22 = int_to_ptr.vmem [resolvable:$true] %s21
      %24 = dma.hbm_to_vmem [thread:$0]  %s20, 64, %s22, [#allocation3]
    $region9: #{tpu_custom_call.1} parent=1 // pred_fallthru
      _
    // Predicated region
    $region10: #{tpu_custom_call.1} parent=1 // pred_check
      _
    $region11: #{tpu_custom_call.1} parent=1 // pred_check_branch
      %26 = sbr.rel (0) target = $region13
    $region12: #{tpu_custom_call.1} parent=1 // pred_region
      _
    $region13: #{tpu_custom_call.1} parent=1 // pred_fallthru
      _
    // Predicated region
    $region14: #{tpu_custom_call.1} parent=1 // pred_check
      _
    $region15: #{tpu_custom_call.1} parent=1 // pred_check_branch
      %28 = sbr.rel (0) target = $region17
    $region16: #{tpu_custom_call.1} parent=1 // pred_region
      %30 = dma.done [#allocation3], 64
    $region17: #{tpu_custom_call.1} parent=1 // pred_fallthru
      _
    %p32 = scmp.eq.s32.totalorder 0, 0
    // Predicated region
    $region18: #{tpu_custom_call.1} parent=1 // pred_check
      %p33 = pneg %p32
    $region19: #{tpu_custom_call.1} parent=1 // pred_check_branch
      %35 = sbr.rel (%p33) target = $region21
    $region20: #{tpu_custom_call.1} parent=1 // pred_region
      %vm36 = vcmask 15360
      %37 = vst.msk [vmem:[%s4] sm:$0xff] %vm36, 0.0
    $region21: #{tpu_custom_call.1} parent=1 // pred_fallthru
      _
    %v38 = vld [vmem:[#allocation2] sm:$0xf]
    %v39 = vld [vmem:[%s2] sm:$0xff]
    %v40 = vld [vmem:[%s0] sm:$0xf]
    %v41 = vpack.c.bf16 %v40, %v40
    %v43 = vunpack.c.l.b16 %v41
    %v44 = vpack.c.b16 %v43, %v43
    %45 = vrot.lane.b32.xlu0 %v44, 1
    %v46 = vpop.permute.xlu0 %45
    %vm47 = vcmask 7168
    %v50 = vsel %vm47, 0, %v46
    %51 = vrot.lane.b32.xlu0 %v44, 127
    %v52 = vpop.permute.xlu0 %51
    %vm53 = vcmask 121856
    %v55 = vsel %vm53, %v52, 0
    %v56 = vrot.slane %v44, 6
    %v58 = vrot.slane %v55, 4
    %vm59 = vcmask 1041408
    %v61 = vsel %vm59, %v50, %v56
    %vm62 = vcmask 1043456
    %v64 = vsel %vm62, %v61, %v58
    %66 = vset.pattern.permute.xlu0 0
    %67 = vperm.xlu0 %66, %v39
    %v68 = vpop.permute.xlu0 %67
    %vm70 = vcmask 97280
    %v72 = vsel %vm70, %v38, 0
    %vm74 = vcmask 1045504
    %v75 = vsel %vm74, %v64, 0
    %77 = vmatpush.bf16.msra.mxu0 0
    %78 = vmatpush.bf16.msra.mxu0 0
    %79 = vmatpush.bf16.msra.mxu0 0
    %80 = vmatpush.bf16.msra.mxu0 0
    %81 = vmatpush.bf16.msra.mxu0 0
    %82 = vmatpush.bf16.msra.mxu0 0
    %83 = vmatpush.bf16.msra.mxu0 0
    %84 = vmatpush.bf16.msra.mxu0 %v75
    %85 = vmatmul.bf16.gmra.mxu0 %v72
    %v86 = vpop.f32.mrf.mxu0
    %v87 = vadd.f32 %v68, %v86
    %v88 = vpop.f32.mrf.mxu0
    %89 = vdwg.mxu0
    %vm90 = vcmask 130048
    %91 = vst.msk [vmem:[#allocation5] sm:$0xff] %vm90, %v87
    %v92 = vsel %vm90, %v87, 0.0
    %93 = vadd.xlane.f32.xlu0 %v92
    %v94 = vpop.xlane.xlu0 %93
    %v95 = vmul.f32 %v87, %v87
    %v96 = vsel %vm90, %v95, 0.0
    %97 = vadd.xlane.f32.xlu0 %v96
    %v98 = vpop.xlane.xlu0 %97
    %v99 = vsel %vm47, %v94, %v98
    %v100 = vadd.f32 %v99, 0.0
    %s101 = scalar_lea.vmem %s0, 4
    %v102 = vld [vmem:[%s101] sm:$0xf]
    %v103 = vpack.c.bf16 %v102, %v102
    %v105 = vunpack.c.l.b16 %v103
    %v106 = vpack.c.b16 %v105, %v105
    %107 = vrot.lane.b32.xlu0 %v106, 1
    %v108 = vpop.permute.xlu0 %107
    %v110 = vsel %vm47, 0, %v108
    %111 = vrot.lane.b32.xlu0 %v106, 127
    %v112 = vpop.permute.xlu0 %111
    %v114 = vsel %vm53, %v112, 0
    %v115 = vrot.slane %v106, 6
    %v117 = vrot.slane %v114, 4
    %v119 = vsel %vm59, %v110, %v115
    %v121 = vsel %vm62, %v119, %v117
    %v122 = vsel %vm74, %v121, 0
    %124 = vmatpush.bf16.msra.mxu0 0
    %125 = vmatpush.bf16.msra.mxu0 0
    %126 = vmatpush.bf16.msra.mxu0 0
    %127 = vmatpush.bf16.msra.mxu0 0
    %128 = vmatpush.bf16.msra.mxu0 0
    %129 = vmatpush.bf16.msra.mxu0 0
    %130 = vmatpush.bf16.msra.mxu0 0
    %131 = vmatpush.bf16.msra.mxu0 %v122
    %132 = vmatmul.bf16.gmra.mxu0 %v72
    %v133 = vpop.f32.mrf.mxu0
    %v134 = vadd.f32 %v68, %v133
    %v135 = vpop.f32.mrf.mxu0
    %136 = vdwg.mxu0
    %s137 = scalar_lea.vmem [#allocation5], 8
    %138 = vst.msk [vmem:[%s137] sm:$0xff] %vm90, %v134
    %v139 = vsel %vm90, %v134, 0.0
    %140 = vadd.xlane.f32.xlu0 %v139
    %v141 = vpop.xlane.xlu0 %140
    %v142 = vmul.f32 %v134, %v134
    %v143 = vsel %vm90, %v142, 0.0
    %144 = vadd.xlane.f32.xlu0 %v143
    %v145 = vpop.xlane.xlu0 %144
    %v146 = vsel %vm47, %v141, %v145
    %v147 = vadd.f32 %v100, %v146
    %v148 = vld [vmem:[%s4] sm:$0xff]
    %v149 = vadd.f32 %v148, %v147
    %vm150 = vcmask 15360
    %151 = vst.msk [vmem:[%s4] sm:$0xff] %vm150, %v149
    // Predicated region
    $region22: #{tpu_custom_call.1} parent=1 // pred_check
      _
    $region23: #{tpu_custom_call.1} parent=1 // pred_check_branch
      %153 = sbr.rel (0) target = $region25
    $region24: #{tpu_custom_call.1} parent=1 // pred_region
      %155 = vsyncadd [#allocation4], 0
      %s156 = sshll.u32 [#allocation5], 4
      %s157 = int_to_ptr.vmem [resolvable:$true] %s156
      %s158 = sshll.u32 %s3, 4
      %s159 = int_to_ptr.hbm [resolvable:$true] %s158
      %164 = dma.vmem_to_hbm [thread:$0]  %s157, 256, %s159, [#allocation4], 128, 128, 8
    $region25: #{tpu_custom_call.1} parent=1 // pred_fallthru
      _
    // Predicated region
    $region26: #{tpu_custom_call.1} parent=1 // pred_check
      _
    $region27: #{tpu_custom_call.1} parent=1 // pred_check_branch
      %166 = sbr.rel (0) target = $region29
    $region28: #{tpu_custom_call.1} parent=1 // pred_region
      _
    $region29: #{tpu_custom_call.1} parent=1 // pred_fallthru
      _
    // Predicated region
    $region30: #{tpu_custom_call.1} parent=1 // pred_check
      _
    $region31: #{tpu_custom_call.1} parent=1 // pred_check_branch
      %168 = sbr.rel (0) target = $region33
    $region32: #{tpu_custom_call.1} parent=1 // pred_region
      %170 = dma.done [#allocation4], 256
    $region33: #{tpu_custom_call.1} parent=1 // pred_fallthru
      _
    // Predicated region
    $region34: #{tpu_custom_call.1} parent=1 // pred_check
      _
    $region35: #{tpu_custom_call.1} parent=1 // pred_check_branch
      %172 = sbr.rel (0) target = $region37
    $region36: #{tpu_custom_call.1} parent=1 // pred_region
      _
    $region37: #{tpu_custom_call.1} parent=1 // pred_fallthru
      _
    %173 = vsyncpa [#allocation3], 1
    %174 = vsyncpa [#allocation4], 1

</llo_original>
